<compile_context>
chip_gen: v5e
topology: v5e:2x2
jax: 0.10.0
libtpu: 0.0.40
codegen_flags: <defaults>
</compile_context>

<pallas_src>
import jax
import jax.numpy as jnp
from jax.experimental import pallas as pl
from jax.experimental.pallas import tpu as pltpu

NEG_SLOPE = 0.2
K = 3  # 3x3 conv


def convblock_kernel(p_ref, w_ref, b_ref, o_ref):
    # p_ref: (1, 9*Cin, HWt)  im2col patches for one batch element / HW tile
    # w_ref: (Cout, 9*Cin)    flattened conv weights (resident, tiny)
    # b_ref: (Cout, 1)        bias column
    # o_ref: (1, Cout, HWt)   lane-dense output slab (natively NCHW)
    acc = jnp.dot(w_ref[...], p_ref[0], preferred_element_type=jnp.float32)
    acc = acc + b_ref[...]                             # broadcast over lanes
    acc = jnp.where(acc >= 0, acc, NEG_SLOPE * acc)    # LeakyReLU(0.2)
    o_ref[0] = acc.astype(o_ref.dtype)


def _pick_hw_tile(hw, max_tile=4096):
    """Largest lane-dense (multiple-of-128) divisor of hw, capped at max_tile."""
    if hw <= max_tile or hw % 128 != 0:
        return hw
    t = max_tile
    while hw % t != 0:
        t -= 128
    return t


def conv_block_forward(x_nchw, w_oihw, bias):
    """Forward pass of ConvBlock. x_nchw: (N, Cin, H, W) float32."""
    N, Cin, H, W = x_nchw.shape
    Cout = w_oihw.shape[0]
    HW = H * W
    KC = K * K * Cin
    hw_tile = _pick_hw_tile(HW)
    hw_steps = pl.cdiv(HW, hw_tile)

    # ---- glue (plain JAX): pad + one-shot im2col + weight flatten.  No
    # activation transposes; output comes back already channel-major (NCHW). --
    x_pad = jnp.pad(x_nchw, ((0, 0), (0, 0), (1, 1), (1, 1)))       # (N,Cin,H+2,W+2)
    taps = [x_pad[:, :, dy:dy + H, dx:dx + W]
            for dy in range(K) for dx in range(K)]                   # 9 x (N,Cin,H,W)
    patches = jnp.stack(taps, axis=1).reshape(N, KC, HW)             # (N, 9*Cin, H*W)

    # PyTorch OIHW -> (Cout, dy, dx, Cin) -> (Cout, 9*Cin); matches patch order
    # (tap-major, channel-minor).
    w_mat = jnp.transpose(w_oihw, (0, 2, 3, 1)).reshape(Cout, KC)
    b_col = bias.reshape(Cout, 1)

    out = pl.pallas_call(
        convblock_kernel,
        out_shape=jax.ShapeDtypeStruct((N, Cout, HW), x_nchw.dtype),
        grid_spec=pltpu.PrefetchScalarGridSpec(
            num_scalar_prefetch=0,
            grid=(N, hw_steps),
            in_specs=[
                pl.BlockSpec((1, KC, hw_tile), lambda n, t: (n, 0, t)),
                pl.BlockSpec((Cout, KC), lambda n, t: (0, 0)),
                pl.BlockSpec((Cout, 1), lambda n, t: (0, 0)),
            ],
            out_specs=pl.BlockSpec((1, Cout, hw_tile), lambda n, t: (n, 0, t)),
        ),
        compiler_params=pltpu.CompilerParams(
            dimension_semantics=("parallel", "parallel"),
        ),
    )(patches, w_mat, b_col)

    # Free reshape: (N, Cout, H*W) is already contiguous NCHW.
    return out.reshape(N, Cout, H, W)


if __name__ == "__main__":
    # ConvBlock(ndims=2, in_channels=4, out_channels=8, stride=1)
    N, Cin, H, W = 2, 4, 16, 16
    Cout = 8

    key = jax.random.PRNGKey(0)
    kx, kw, kb = jax.random.split(key, 3)
    x = jax.random.normal(kx, (N, Cin, H, W), dtype=jnp.float32)
    # Deterministic synthetic params (PyTorch conv weight layout: OIHW).
    w = 0.1 * jax.random.normal(kw, (Cout, Cin, K, K), dtype=jnp.float32)
    b = 0.1 * jax.random.normal(kb, (Cout,), dtype=jnp.float32)

    out = conv_block_forward(x, w, b)
    out = jax.block_until_ready(out)

    # Reference check against XLA conv (NCHW, OIHW) + LeakyReLU(0.2).
    ref = jax.lax.conv_general_dilated(
        x, w, window_strides=(1, 1), padding=((1, 1), (1, 1)),
        dimension_numbers=("NCHW", "OIHW", "NCHW"),
    ) + b.reshape(1, Cout, 1, 1)
    ref = jnp.where(ref >= 0, ref, NEG_SLOPE * ref)
    assert out.shape == (N, Cout, H, W)
    assert jnp.allclose(out, ref, atol=1e-4, rtol=1e-4)

    print("KERNEL_OK")
</pallas_src>

<mosaic_0001>
module attributes {stable_mosaic.version = 11 : i64} {
  func.func @convblock_kernel(%arg0: i32, %arg1: i32, %arg2: memref<1x36x256xf32, #tpu.memory_space<vmem>>, %arg3: memref<8x36xf32, #tpu.memory_space<vmem>>, %arg4: memref<8x1xf32, #tpu.memory_space<vmem>>, %arg5: memref<1x8x256xf32, #tpu.memory_space<vmem>>) attributes {dimension_semantics = [#tpu.dimension_semantics<parallel>, #tpu.dimension_semantics<parallel>], iteration_bounds = array<i64: 2, 1>, scalar_prefetch = 0 : i64, scratch_operands = 0 : i64, tpu.core_type = #tpu.core_type<tc>, window_params = [{transform_indices = @transform_0, window_bounds = array<i64: 1, 36, 256>}, {pipeline_mode = #tpu.pipeline_mode<synchronous>, transform_indices = @transform_1, window_bounds = array<i64: 8, 36>}, {pipeline_mode = #tpu.pipeline_mode<synchronous>, transform_indices = @transform_2, window_bounds = array<i64: 8, 1>}, {transform_indices = @transform_3, window_bounds = array<i64: 1, 8, 256>}]} {
    %c0 = arith.constant 0 : index
    %c0_0 = arith.constant 0 : index
    %0 = vector.load %arg3[%c0, %c0_0] : memref<8x36xf32, #tpu.memory_space<vmem>>, vector<8x36xf32>
    %c0_1 = arith.constant 0 : index
    %c0_2 = arith.constant 0 : index
    %c0_3 = arith.constant 0 : index
    %1 = vector.load %arg2[%c0_1, %c0_2, %c0_3] : memref<1x36x256xf32, #tpu.memory_space<vmem>>, vector<1x36x256xf32>
    %2 = vector.shape_cast %1 : vector<1x36x256xf32> to vector<36x256xf32>
    %cst = arith.constant dense<0.000000e+00> : vector<8x256xf32>
    %3 = tpu.matmul %0, %2, %cst {dimension_numbers = #tpu.dot_dimension_numbers<[1], [0], [0], [1], [0, 0, 1, 1], [], []>} : vector<8x36xf32>, vector<36x256xf32>, vector<8x256xf32> -> vector<8x256xf32>
    %c0_4 = arith.constant 0 : index
    %c0_5 = arith.constant 0 : index
    %4 = vector.load %arg4[%c0_4, %c0_5] : memref<8x1xf32, #tpu.memory_space<vmem>>, vector<8x1xf32>
    %5 = vector.broadcast %4 : vector<8x1xf32> to vector<8x256xf32>
    %6 = arith.addf %3, %5 : vector<8x256xf32>
    %cst_6 = arith.constant 0.000000e+00 : f32
    %7 = vector.broadcast %cst_6 : f32 to vector<8x256xf32>
    %8 = arith.cmpf oge, %6, %7 : vector<8x256xf32>
    %cst_7 = arith.constant 2.000000e-01 : f32
    %9 = vector.broadcast %cst_7 : f32 to vector<8x256xf32>
    %10 = arith.mulf %9, %6 : vector<8x256xf32>
    %11 = arith.select %8, %6, %10 : vector<8x256xi1>, vector<8x256xf32>
    %c0_8 = arith.constant 0 : index
    %c0_9 = arith.constant 0 : index
    %c0_10 = arith.constant 0 : index
    %12 = vector.load %arg5[%c0_8, %c0_9, %c0_10] : memref<1x8x256xf32, #tpu.memory_space<vmem>>, vector<1x8x256xf32>
    %13 = vector.shape_cast %12 : vector<1x8x256xf32> to vector<8x256xf32>
    %14 = vector.shape_cast %11 : vector<8x256xf32> to vector<1x8x256xf32>
    tpu.vector_store %arg5[%c0_8, %c0_9, %c0_10], %14 {strides = array<i32>} : memref<1x8x256xf32, #tpu.memory_space<vmem>>, vector<1x8x256xf32>,
    return
  }
  func.func @transform_0(%arg0: i32, %arg1: i32) -> (i32, i32, i32) {
    %c0_i32 = arith.constant 0 : i32
    %c0_i32_0 = arith.constant 0 : i32
    return %arg0, %c0_i32, %arg1 : i32, i32, i32
  }
  func.func @transform_1(%arg0: i32, %arg1: i32) -> (i32, i32) {
    %c0_i32 = arith.constant 0 : i32
    %c0_i32_0 = arith.constant 0 : i32
    %c0_i32_1 = arith.constant 0 : i32
    return %c0_i32, %c0_i32_0 : i32, i32
  }
  func.func @transform_2(%arg0: i32, %arg1: i32) -> (i32, i32) {
    %c0_i32 = arith.constant 0 : i32
    %c0_i32_0 = arith.constant 0 : i32
    %c0_i32_1 = arith.constant 0 : i32
    return %c0_i32, %c0_i32_0 : i32, i32
  }
  func.func @transform_3(%arg0: i32, %arg1: i32) -> (i32, i32, i32) {
    %c0_i32 = arith.constant 0 : i32
    %c0_i32_0 = arith.constant 0 : i32
    return %arg0, %c0_i32, %arg1 : i32, i32, i32
  }
}

</mosaic_0001>

<llo_original>
// kernel: tpu_custom_call.1
$region0: #{tpu_custom_call.1}
  #allocation0 [shape = 'u32[]', space=smem, size = 0x4, offset = 0x4, fixed_abs, tag = 'smem constant byte address 0x4 - core index']
  #allocation1 [shape = 'u32[72,128]{1,0:T(1,128)}', space=vmem, size = 0x9000, scoped, tag = 'internal scratch']
  %s0 = inlined_call_operand.vmem [shape: f32[2,36,256], index: 0, kind: input, shape index: {}]
  %s1 = inlined_call_operand.vmem [shape: f32[8,36], index: 1, kind: input, shape index: {}]
  %s2 = inlined_call_operand.vmem [shape: f32[8,1], index: 2, kind: input, shape index: {}]
  %s3 = inlined_call_operand.hbm [shape: f32[2,8,256], index: 3, kind: output, shape index: {}]
  %s4 = sld [smem:[#allocation0]]
  $region45: #{tpu_custom_call.1} parent=0
    _
  %s6 = ssub.s32 1, %s4
  %s7 = scalar_select 0, %s6, %s4
  $region1: #{tpu_custom_call.1} parent=0
    #allocation2 [shape = 'u8[16384]{0}', space=vmem, size = 0x4000, scoped, tag = 'output window, operand 0']
    #allocation3 [shape = 's32[2]{0}', space=sflag, size = 0x8, scoped, tag = 'scoped memory for tpu_custom_call.1']
    %8 = vsyncpa [#allocation3], 0
    %s9 = scalar_lea.sflag [#allocation3], 1
    %10 = vsyncpa %s9, 0
    loop: start=0, step=1, limit=4
    $region2: #{tpu_custom_call.1} parent=1 // loop_pre_header
      _
    $region3: #{tpu_custom_call.1} parent=1 // loop_header
      %s12 = sphi 0, %s16
      %p13 = scmp.ge.s32.totalorder %s12, 4
      %s19 = sphi 0, %s31
      %s20 = sphi 0, %s27
      %s21 = sphi 0, %s19
      %s22 = sphi 0, %s20
      %s23 = sphi 0, %s21
      %s24 = sphi 0, %s22
      %s36 = sphi 0, %s38
      %s39 = sphi 0, %s36
      %s40 = sphi 0, %s39
      %s56 = sphi 0, %s40
      %s60 = sphi 0, %s60
      %s62 = sphi 0, %s60
      %s63 = sphi 0, %s62
      %s77 = sphi 0, %s63
      %s81 = sphi 0, %s81
      %s83 = sphi 0, %s81
      %s84 = sphi 0, %s83
      %s98 = sphi 0, %s84
      %s106 = sphi 0, %s108
      %s109 = sphi 0, %s106
      %s110 = sphi 0, %s109
      %s126 = sphi 0, %s110
    $region4: #{tpu_custom_call.1} parent=1 // loop_header_branch
      %15 = sbr.rel (%p13) target = $region8
    $region5: #{tpu_custom_call.1} parent=1 // loop_body
      %s17 = ssub.s32 %s12, 1
      %s18 = ssub.s32 %s12, 2
      %s25 = sadd.s32 1, %s20
      %p26 = scmp.ge.s32.totalorder %s25, 1
      %s27 = scalar_select %p26, 0, %s25
      %s28 = sadd.s32 1, %s19
      %s29 = scalar_select %p26, %s28, %s19
      %p30 = scmp.ge.s32.totalorder %s29, 2
      %s31 = scalar_select %p30, 0, %s29
      %s32 = ssub.s32 %s19, %s31
      %s33 = ssub.s32 %s20, %s27
      %s34 = sor.u32 %s32, %s33
      %p35 = scmp.eq.s32.totalorder %s34, 0
      %s37 = sadd.s32 %s36, 1
      %s38 = scalar_select %p35, %s36, %s37
      %p41 = pneg %p35
      %p42 = scmp.eq.s32.totalorder %s12, 1
      %p43 = por %p41, %p42
      %p44 = scmp.ne.s32.totalorder %s36, %s39
      %p45 = scmp.eq.s32.totalorder %s12, 0
      %p46 = por %p44, %p45
      %p47 = scmp.ne.s32.totalorder %s36, %s39
      %p48 = scmp.eq.s32.totalorder %s17, 1
      %p49 = por %p47, %p48
      %p50 = scmp.ne.s32.totalorder %s39, %s40
      %p51 = scmp.eq.s32.totalorder %s17, 0
      %p52 = por %p50, %p51
      %p53 = scmp.ne.s32.totalorder %s39, %s40
      %p54 = scmp.eq.s32.totalorder %s18, 1
      %p55 = por %p53, %p54
      %p57 = scmp.ne.s32.totalorder %s40, %s56
      %p58 = scmp.eq.s32.totalorder %s18, 0
      %p59 = por %p57, %p58
      %s61 = sadd.s32 %s60, 1
      %p64 = scmp.eq.s32.totalorder %s12, 1
      %p65 = scmp.ne.s32.totalorder %s60, %s62
      %p66 = scmp.eq.s32.totalorder %s12, 0
      %p67 = por %p65, %p66
      %p68 = scmp.ne.s32.totalorder %s60, %s62
      %p69 = scmp.eq.s32.totalorder %s17, 1
      %p70 = por %p68, %p69
      %p71 = scmp.ne.s32.totalorder %s62, %s63
      %p72 = scmp.eq.s32.totalorder %s17, 0
      %p73 = por %p71, %p72
      %p74 = scmp.ne.s32.totalorder %s62, %s63
      %p75 = scmp.eq.s32.totalorder %s18, 1
      %p76 = por %p74, %p75
      %p78 = scmp.ne.s32.totalorder %s63, %s77
      %p79 = scmp.eq.s32.totalorder %s18, 0
      %p80 = por %p78, %p79
      %s82 = sadd.s32 %s81, 1
      %p85 = scmp.eq.s32.totalorder %s12, 1
      %p86 = scmp.ne.s32.totalorder %s81, %s83
      %p87 = scmp.eq.s32.totalorder %s12, 0
      %p88 = por %p86, %p87
      %p89 = scmp.ne.s32.totalorder %s81, %s83
      %p90 = scmp.eq.s32.totalorder %s17, 1
      %p91 = por %p89, %p90
      %p92 = scmp.ne.s32.totalorder %s83, %s84
      %p93 = scmp.eq.s32.totalorder %s17, 0
      %p94 = por %p92, %p93
      %p95 = scmp.ne.s32.totalorder %s83, %s84
      %p96 = scmp.eq.s32.totalorder %s18, 1
      %p97 = por %p95, %p96
      %p99 = scmp.ne.s32.totalorder %s84, %s98
      %p100 = scmp.eq.s32.totalorder %s18, 0
      %p101 = por %p99, %p100
      %s102 = ssub.s32 %s19, %s31
      %s103 = ssub.s32 %s20, %s27
      %s104 = sor.u32 %s102, %s103
      %p105 = scmp.eq.s32.totalorder %s104, 0
      %s107 = sadd.s32 %s106, 1
      %s108 = scalar_select %p105, %s106, %s107
      %p111 = pneg %p105
      %p112 = scmp.eq.s32.totalorder %s12, 1
      %p113 = por %p111, %p112
      %p114 = scmp.ne.s32.totalorder %s106, %s109
      %p115 = scmp.eq.s32.totalorder %s12, 0
      %p116 = por %p114, %p115
      %p117 = scmp.ne.s32.totalorder %s106, %s109
      %p118 = scmp.eq.s32.totalorder %s17, 1
      %p119 = por %p117, %p118
      %p120 = scmp.ne.s32.totalorder %s109, %s110
      %p121 = scmp.eq.s32.totalorder %s17, 0
      %p122 = por %p120, %p121
      %p123 = scmp.ne.s32.totalorder %s109, %s110
      %p124 = scmp.eq.s32.totalorder %s18, 1
      %p125 = por %p123, %p124
      %p127 = scmp.ne.s32.totalorder %s110, %s126
      %p128 = scmp.eq.s32.totalorder %s18, 0
      %p129 = por %p127, %p128
      %p130 = scmp.le.s32.totalorder 1, %s12
      %p131 = scmp.lt.s32.totalorder %s12, 3
      %p132 = pnand %p130, %p131
      %p133 = pneg %p132
      // Predicated region
      $region9: #{tpu_custom_call.1} parent=5 // pred_check
        _
      $region10: #{tpu_custom_call.1} parent=5 // pred_check_branch
        %135 = sbr.rel (%p132) target = $region12
      $region11: #{tpu_custom_call.1} parent=5 // pred_region
        %s136 = ssub.s32 %s12, 1
        // Predicated region
        $region13: #{tpu_custom_call.1} parent=11 // pred_check
          %p137 = pneg %p73
        $region14: #{tpu_custom_call.1} parent=11 // pred_check_branch
          %139 = sbr.rel (%p137) target = $region16
        $region15: #{tpu_custom_call.1} parent=11 // pred_region
          _
        $region16: #{tpu_custom_call.1} parent=11 // pred_fallthru
          _
        // Predicated region
        $region17: #{tpu_custom_call.1} parent=11 // pred_check
          %p140 = pneg %p94
        $region18: #{tpu_custom_call.1} parent=11 // pred_check_branch
          %142 = sbr.rel (%p140) target = $region20
        $region19: #{tpu_custom_call.1} parent=11 // pred_region
          _
        $region20: #{tpu_custom_call.1} parent=11 // pred_fallthru
          _
      $region12: #{tpu_custom_call.1} parent=5 // pred_fallthru
        _
      %p143 = scmp.lt.s32.totalorder %s12, 2
      // Predicated region
      $region21: #{tpu_custom_call.1} parent=5 // pred_check
        %p144 = pneg %p143
      $region22: #{tpu_custom_call.1} parent=5 // pred_check_branch
        %146 = sbr.rel (%p144) target = $region24
      $region23: #{tpu_custom_call.1} parent=5 // pred_region
        // Predicated region
        $region25: #{tpu_custom_call.1} parent=23 // pred_check
          %p147 = pneg %p46
        $region26: #{tpu_custom_call.1} parent=23 // pred_check_branch
          %149 = sbr.rel (%p147) target = $region28
        $region27: #{tpu_custom_call.1} parent=23 // pred_region
          %s150 = smul.u32 2, %s20
          %p151 = scmp.lt.s32.totalorder %s19, 1
          %s152 = scalar_select %p151, %s19, 1
          %p153 = scmp.lt.s32.totalorder %s150, 1
          %s154 = scalar_select %p153, %s150, 1
          %s155 = smul.addr %s152, 10
          %s156 = sadd.s32 %s154, %s155
          %s157 = smul.addr %s156, 8
          %s158 = scalar_lea.vmem %s0, %s157
          %s159 = smul.u32 2, %s20
        $region28: #{tpu_custom_call.1} parent=23 // pred_fallthru
          _
      $region24: #{tpu_custom_call.1} parent=5 // pred_fallthru
        _
      %p160 = scmp.le.s32.totalorder 1, %s12
      %p161 = scmp.lt.s32.totalorder %s12, 3
      %p162 = pnand %p160, %p161
      %p163 = pneg %p162
      // Predicated region
      $region29: #{tpu_custom_call.1} parent=5 // pred_check
        _
      $region30: #{tpu_custom_call.1} parent=5 // pred_check_branch
        %165 = sbr.rel (%p162) target = $region32
      $region31: #{tpu_custom_call.1} parent=5 // pred_region
        %s166 = ssub.s32 %s12, 1
        %s167 = smul.u32 2, %s22
        %p168 = scmp.lt.s32.totalorder %s21, 1
        %s169 = scalar_select %p168, %s21, 1
        %p170 = scmp.lt.s32.totalorder %s167, 1
        %s171 = scalar_select %p170, %s167, 1
        %s172 = smul.addr %s169, 10
        %s173 = sadd.s32 %s171, %s172
        %s174 = smul.addr %s173, 8
        %s175 = scalar_lea.vmem %s0, %s174
        %p176 = pneg %p52
        %p177 = pneg %p49
        %p178 = pneg %p73
        %p179 = pneg %p70
        %p180 = pneg %p94
        %p181 = pneg %p91
        %p182 = pneg %p122
        %p183 = pneg %p119
        %s184 = sand.u32 %s109, 1
        %s185 = scalar_lea.sflag [#allocation3], %s184
        %s186 = sand.u32 %s109, 1
        %s187 = smul.addr %s186, 16
        %s188 = scalar_lea.vmem [#allocation2], %s187
        %s189 = smul.u32 2, %s22
        %p190 = scmp.lt.s32.totalorder %s21, 1
        %s191 = scalar_select %p190, %s21, 1
        %p192 = scmp.lt.s32.totalorder %s189, 1
        %s193 = scalar_select %p192, %s189, 1
        %s194 = smul.addr %s191, 10
        %s195 = sadd.s32 %s193, %s194
        %s196 = smul.addr %s195, 8
        %s197 = scalar_lea.vmem %s0, %s196
        %s198 = smul.u32 2, %s22
        %s199 = smul.u32 2, %s22
        %v200 = vld [vmem:[%s1] sm:$0xff]
        %v201 = vld [vmem:[%s197] sm:$0xff]
        %v202 = vld [vmem:[%s197 + $0x8] sm:$0xff]
        %v203 = vld [vmem:[%s197 + $0x10] sm:$0xff]
        %v204 = vld [vmem:[%s197 + $0x18] sm:$0xff]
        %v205 = vld [vmem:[%s197 + $0x20] sm:$0xff]
        %v206 = vld [vmem:[%s197 + $0x28] sm:$0xff]
        %v207 = vld [vmem:[%s197 + $0x30] sm:$0xff]
        %v208 = vld [vmem:[%s197 + $0x38] sm:$0xff]
        %v209 = vld [vmem:[%s197 + $0x40] sm:$0xf]
        %v210 = vld [vmem:[%s197 + $0x48] sm:$0xf]
        %v211 = vld [vmem:[%s2] sm:$0xff]
        %213 = vset.pattern.permute.xlu0 0
        %214 = vperm.xlu0 %213, %v211
        %v215 = vpop.permute.xlu0 %214
        %vm217 = vcmask 293888
        %v219 = vsel %vm217, %v200, 0
        %vm221 = vcmask 1043456
        %v223 = vsel %vm221, %v209, 0
        %v226 = vsel %vm221, %v210, 0
        %228 = vmatpush.msra.mxu0 0.0
        %229 = vmatpush.msra.mxu0 0.0
        %230 = vmatpush.msra.mxu0 0.0
        %231 = vmatpush.msra.mxu0 0.0
        %232 = vmatpush.msra.mxu0 0.0
        %233 = vmatpush.msra.mxu0 0.0
        %234 = vmatpush.msra.mxu0 0.0
        %235 = vmatpush.msra.mxu0 0.0
        %236 = vmatpush.msra.mxu0 0.0
        %237 = vmatpush.msra.mxu0 0.0
        %238 = vmatpush.msra.mxu0 0.0
        %239 = vmatpush.msra.mxu0 %v223
        %240 = vmatpush.msra.mxu0 %v207
        %241 = vmatpush.msra.mxu0 %v205
        %242 = vmatpush.msra.mxu0 %v203
        %243 = vmatpush.msra.mxu0 %v201
        %244 = vmatmul.f32.gmra.mxu0 %v219
        %v245 = vpop.f32.mrf.mxu0
        %v246 = vadd.f32 %v215, %v245
        %247 = vdwg.mxu0
        %248 = vmatpush.msra.mxu0 0.0
        %249 = vmatpush.msra.mxu0 0.0
        %250 = vmatpush.msra.mxu0 0.0
        %251 = vmatpush.msra.mxu0 0.0
        %252 = vmatpush.msra.mxu0 0.0
        %253 = vmatpush.msra.mxu0 0.0
        %254 = vmatpush.msra.mxu0 0.0
        %255 = vmatpush.msra.mxu0 0.0
        %256 = vmatpush.msra.mxu0 0.0
        %257 = vmatpush.msra.mxu0 0.0
        %258 = vmatpush.msra.mxu0 0.0
        %259 = vmatpush.msra.mxu0 %v226
        %260 = vmatpush.msra.mxu0 %v208
        %261 = vmatpush.msra.mxu0 %v206
        %262 = vmatpush.msra.mxu0 %v204
        %263 = vmatpush.msra.mxu0 %v202
        %264 = vmatmul.f32.gmra.mxu0 %v219
        %v265 = vpop.f32.mrf.mxu0
        %v266 = vadd.f32 %v215, %v265
        %267 = vdwg.mxu0
        %vm268 = vcmp.ge.f32.partialorder %v246, 0.0
        %vm269 = vcmp.ge.f32.partialorder %v266, 0.0
        %v270 = vmul.f32 %v246, 0.2
        %v271 = vmul.f32 %v266, 0.2
        %v272 = vsel %vm268, %v246, %v270
        %v273 = vsel %vm269, %v266, %v271
        %274 = vst [vmem:[%s188] sm:$0xff] %v272
        %275 = vst [vmem:[%s188 + $0x8] sm:$0xff] %v273
        %s276 = sand.u32 %s109, 1
        %s277 = scalar_lea.sflag [#allocation3], %s276
        %s278 = sand.u32 %s109, 1
        %s279 = smul.addr %s278, 16
        %s280 = scalar_lea.vmem [#allocation2], %s279
        // Predicated region
        $region33: #{tpu_custom_call.1} parent=31 // pred_check
          %p281 = pneg %p119
        $region34: #{tpu_custom_call.1} parent=31 // pred_check_branch
          %283 = sbr.rel (%p281) target = $region36
        $region35: #{tpu_custom_call.1} parent=31 // pred_region
          %s284 = smul.u32 2, %s22
          %286 = vsyncadd %s277, 0
          %s287 = smul.addr %s21, 2
          %s288 = sadd.s32 %s284, %s287
          %s289 = smul.addr %s288, 8
          %s290 = scalar_lea.hbm %s3, %s289
          %s292 = sshll.u32 %s280, 4
          %s293 = int_to_ptr.vmem [resolvable:$true] %s292
          %s294 = sshll.u32 %s290, 4
          %s295 = int_to_ptr.hbm [resolvable:$true] %s294
          %297 = dma.vmem_to_hbm [thread:$0]  %s293, 256, %s295, %s277
        $region36: #{tpu_custom_call.1} parent=31 // pred_fallthru
          _
      $region32: #{tpu_custom_call.1} parent=5 // pred_fallthru
        _
      %p298 = scmp.le.s32.totalorder 2, %s12
      // Predicated region
      $region37: #{tpu_custom_call.1} parent=5 // pred_check
        %p299 = pneg %p298
      $region38: #{tpu_custom_call.1} parent=5 // pred_check_branch
        %301 = sbr.rel (%p299) target = $region40
      $region39: #{tpu_custom_call.1} parent=5 // pred_region
        %s302 = ssub.s32 %s12, 2
        // Predicated region
        $region41: #{tpu_custom_call.1} parent=39 // pred_check
          %p303 = pneg %p125
        $region42: #{tpu_custom_call.1} parent=39 // pred_check_branch
          %305 = sbr.rel (%p303) target = $region44
        $region43: #{tpu_custom_call.1} parent=39 // pred_region
          %s306 = sand.u32 %s110, 1
          %s307 = scalar_lea.sflag [#allocation3], %s306
          %s308 = sand.u32 %s110, 1
          %s309 = smul.addr %s308, 16
          %s310 = scalar_lea.vmem [#allocation2], %s309
          %312 = dma.done %s307, 256
        $region44: #{tpu_custom_call.1} parent=39 // pred_fallthru
          _
      $region40: #{tpu_custom_call.1} parent=5 // pred_fallthru
        _
    $region6: #{tpu_custom_call.1} parent=1 // loop_footer
      %s16 = sadd.s32 1, %s12
    $region7: #{tpu_custom_call.1} parent=1 // loop_footer_branch
      %11 = sbr.rel target = $region3
    $region8: #{tpu_custom_call.1} parent=1 // loop_exit
      _
    %313 = vsyncpa [#allocation3], 1
    %s314 = scalar_lea.sflag [#allocation3], 1
    %315 = vsyncpa %s314, 1

</llo_original>
